<compile_context>
chip_gen: v5e
topology: v5e:2x2
jax: 0.10.0
libtpu: 0.0.40
codegen_flags: <defaults>
</compile_context>

<pallas_src>
import functools

import jax
import jax.numpy as jnp
from jax.experimental import pallas as pl
from jax.experimental.pallas import tpu as pltpu


def _vq_kernel(x_ref, emb_ref, ehalf_ref, q_ref, idx_ref, sse_ref,
               *, num_embeddings, q_transposed):
    """One grid step quantizes a (tm, D) slab of flattened input rows.

    x_ref    : (tm, D)    input rows, natural layout (contiguous DMA)
    emb_ref  : (K, D)     f32 codebook (grid-invariant)
    ehalf_ref: (K, 1)     f32 0.5 * |e_k|^2 (hoisted to the wrapper)
    q_ref    : (tm, D) f32 (natural)  or  (D, tm) f32 (lane-dense for D < 128)
    idx_ref  : (1, 1, tm) i32 argmin indices (lane-dense)
    sse_ref  : (1, 1, tm) f32 per-row squared error (lane-dense)
    """
    x = x_ref[...].astype(jnp.float32)                                # (tm, D)
    emb = emb_ref[...]                                                # (K, D)
    e_half = ehalf_ref[...]                                           # (K, 1)

    # argmin_k(|x|^2 + |e_k|^2 - 2 x.e_k) == argmin_k(0.5|e_k|^2 - x.e_k):
    # the per-row |x|^2 term cannot change the argmin, so it is dropped.
    # cross[k, t] = e_k . x_t  -- contract D with D (A @ B^T on the MXU).
    cross = jax.lax.dot_general(emb, x, (((1,), (1,)), ((), ())),
                                preferred_element_type=jnp.float32)   # (K, tm)
    score = e_half - cross                                            # (K, tm)

    # first-index-wins argmin over the codebook (sublane) axis, all in int32
    s_min = jnp.min(score, axis=0, keepdims=True)                     # (1, tm)
    iota_k = jax.lax.broadcasted_iota(jnp.int32, score.shape, 0)      # (K, tm)
    idx = jnp.min(jnp.where(score == s_min, iota_k, num_embeddings),
                  axis=0, keepdims=True)                              # (1, tm) i32

    # quantized = one-hot selection of codebook rows (the scatter_+matmul path)
    one_hot = (iota_k == idx).astype(jnp.float32)                     # (K, tm)

    if q_transposed:
        # emb^T @ one_hot -> (D, tm): lane-dense stores when D < 128.
        quant = jax.lax.dot_general(emb, one_hot, (((0,), (0,)), ((), ())),
                                    preferred_element_type=jnp.float32)
        q_ref[...] = quant.astype(q_ref.dtype)
        diff = quant - x.T                                            # (D, tm)
        sse = jnp.sum(diff * diff, axis=0, keepdims=True)             # (1, tm)
    else:
        # one_hot^T @ emb -> (tm, D): natural layout, contiguous DMA out.
        quant = jax.lax.dot_general(one_hot, emb, (((0,), (0,)), ((), ())),
                                    preferred_element_type=jnp.float32)
        q_ref[...] = quant.astype(q_ref.dtype)
        diff = quant - x                                              # (tm, D)
        ones = jnp.ones((1, diff.shape[1]), jnp.float32)
        # row-SSE as a lane-dense (1, tm) matvec (avoids a sublane relayout)
        sse = jax.lax.dot_general(ones, diff * diff, (((1,), (1,)), ((), ())),
                                  preferred_element_type=jnp.float32)

    idx_ref[...] = idx.reshape(idx_ref.shape)
    sse_ref[...] = sse.reshape(sse_ref.shape)


def vector_quantizer(inputs, embedding, commitment_cost, *, tm=512):
    """Forward pass of VectorQuantizer.

    inputs    : (..., D) float32/bfloat16, channels-last
    embedding : (K, D)   codebook
    Returns (loss, quantized, encoding_indices) matching the PyTorch module.
    """
    input_shape = inputs.shape
    num_embeddings, embedding_dim = embedding.shape
    flat = inputs.reshape(-1, embedding_dim)
    if flat.dtype not in (jnp.float32, jnp.bfloat16):
        flat = flat.astype(jnp.float32)
    n_rows = flat.shape[0]

    # ---- lane-tile selection (VMEM- and megacore-aware) --------------------
    # ~5 live (K, tm) f32 intermediates (cross/score, iota, where-result,
    # one_hot) must fit the default scoped VMEM on every generation, so cap tm
    # by K; also never tile beyond the (padded) row count, and prefer >= 2
    # grid steps so v7x's two TensorCores both get work.
    tm_cap_k = max(128, ((8 << 20) // (5 * num_embeddings * 4)) // 128 * 128)
    tm_cap_rows = ((n_rows + 127) // 128) * 128
    tm = max(128, (min(tm, tm_cap_k, tm_cap_rows) // 128) * 128)
    while tm > 128 and (n_rows + tm - 1) // tm < 2:
        tm -= 128
    n_pad = ((n_rows + tm - 1) // tm) * tm
    num_tiles = n_pad // tm

    pad = n_pad - n_rows
    if pad:
        flat = jnp.pad(flat, ((0, pad), (0, 0)))

    emb = embedding.astype(jnp.float32)                               # (K, D)
    e_half_sq = 0.5 * jnp.sum(emb * emb, axis=1, keepdims=True)       # (K, 1)

    # For D < 128 a natural-layout (tm, D) q block would store via masked
    # vst.msk, so write a lane-dense (D, tm) slab instead and transpose once
    # in the wrapper; for D >= 128 write natural layout (no wrapper transpose).
    q_transposed = embedding_dim < 128
    kernel = functools.partial(_vq_kernel, num_embeddings=num_embeddings,
                               q_transposed=q_transposed)

    if q_transposed:
        q_shape = jax.ShapeDtypeStruct((embedding_dim, n_pad), jnp.float32)
        q_spec = pl.BlockSpec((embedding_dim, tm), lambda i: (0, i))
    else:
        q_shape = jax.ShapeDtypeStruct((n_pad, embedding_dim), jnp.float32)
        q_spec = pl.BlockSpec((tm, embedding_dim), lambda i: (i, 0))

    # Rough VMEM need: K*tm intermediates + double-buffered x/q blocks +
    # double-buffered resident codebook / norms.  Only raise the scoped limit
    # when a huge codebook makes the default insufficient even at tm=128.
    est_vmem = (5 * num_embeddings * tm * 4
                + 2 * 2 * tm * embedding_dim * 4
                + 2 * (num_embeddings * embedding_dim + 128 * num_embeddings) * 4)
    cp_kwargs = dict(dimension_semantics=("parallel",))
    if est_vmem > (12 << 20):
        cp_kwargs["vmem_limit_bytes"] = int(min(48 << 20, 2 * est_vmem))

    # Memory-bound kernel: advise XLA's scheduler with a cost estimate.
    flops = 4 * n_pad * embedding_dim * num_embeddings
    bytes_accessed = (flat.dtype.itemsize * n_pad * embedding_dim     # x read
                      + 4 * n_pad * embedding_dim                     # q write
                      + 8 * n_pad                                     # idx + sse
                      + 4 * num_embeddings * (embedding_dim + 1))     # codebook

    q_out, idx_tiles, sse_tiles = pl.pallas_call(
        kernel,
        out_shape=(
            q_shape,
            jax.ShapeDtypeStruct((num_tiles, 1, tm), jnp.int32),
            jax.ShapeDtypeStruct((num_tiles, 1, tm), jnp.float32),
        ),
        grid_spec=pltpu.PrefetchScalarGridSpec(
            num_scalar_prefetch=0,
            grid=(num_tiles,),
            in_specs=[
                pl.BlockSpec((tm, embedding_dim), lambda i: (i, 0)),
                pl.BlockSpec((num_embeddings, embedding_dim), lambda i: (0, 0)),
                pl.BlockSpec((num_embeddings, 1), lambda i: (0, 0)),
            ],
            out_specs=(
                q_spec,
                pl.BlockSpec((1, 1, tm), lambda i: (i, 0, 0)),
                pl.BlockSpec((1, 1, tm), lambda i: (i, 0, 0)),
            ),
        ),
        compiler_params=pltpu.CompilerParams(**cp_kwargs),
        cost_estimate=pl.CostEstimate(flops=int(flops), transcendentals=0,
                                      bytes_accessed=int(bytes_accessed)),
    )(flat, emb, e_half_sq)

    if q_transposed:
        q_flat = q_out.T[:n_rows]                                     # (n_rows, D)
    else:
        q_flat = q_out[:n_rows]                                       # (n_rows, D)
    idx = idx_tiles.reshape(n_pad)[:n_rows].reshape(-1, 1)            # (n_rows, 1)
    sse = jnp.sum(sse_tiles.reshape(n_pad)[:n_rows])                  # drop padding

    mse = sse / jnp.float32(n_rows * embedding_dim)
    # Forward value: q_latent_loss == e_latent_loss == mse (detach only affects grads).
    loss = (1.0 + commitment_cost) * mse

    quantized = q_flat.reshape(input_shape).astype(inputs.dtype)
    # straight-through estimator (forward value is just `quantized`)
    # TODO(synk): forward-only; a custom_vjp would be needed to reproduce the
    # PyTorch module's gradients for the codebook / commitment loss terms.
    quantized = inputs + jax.lax.stop_gradient(quantized - inputs)

    return loss, quantized, idx


if __name__ == "__main__":
    num_embeddings = 32
    embedding_dim = 16
    commitment_cost = 0.25

    key = jax.random.PRNGKey(0)
    k_emb, k_x = jax.random.split(key)

    # deterministic codebook init, matching nn.Embedding(...).uniform_(-1/K, 1/K)
    embedding = jax.random.uniform(
        k_emb, (num_embeddings, embedding_dim), jnp.float32,
        minval=-1.0 / num_embeddings, maxval=1.0 / num_embeddings)

    # small channels-last input (B, H, W, D) -> flattens to (32, 16) rows
    x = jax.random.normal(k_x, (2, 4, 4, embedding_dim), jnp.float32) * 0.1

    loss, quantized, indices = vector_quantizer(x, embedding, commitment_cost)
    jax.block_until_ready((loss, quantized, indices))

    # pure-JAX reference check
    flat = x.reshape(-1, embedding_dim)
    d_ref = (jnp.sum(flat**2, 1, keepdims=True) + jnp.sum(embedding**2, 1)
             - 2.0 * flat @ embedding.T)
    idx_ref = jnp.argmin(d_ref, axis=1)
    q_ref = embedding[idx_ref].reshape(x.shape)
    mse_ref = jnp.mean((q_ref - x) ** 2)
    loss_ref = (1.0 + commitment_cost) * mse_ref

    assert quantized.shape == x.shape, "quantized shape mismatch"
    assert indices.shape == (flat.shape[0], 1), "indices shape mismatch"
    assert jnp.allclose(quantized, q_ref, atol=1e-5), "quantized mismatch"
    assert jnp.array_equal(indices[:, 0], idx_ref.astype(jnp.int32)), "index mismatch"
    assert jnp.allclose(loss, loss_ref, atol=1e-6, rtol=1e-5), "loss mismatch"

    print("KERNEL_OK")
</pallas_src>

<mosaic_0001>
module attributes {stable_mosaic.version = 11 : i64} {
  func.func @_vq_kernel(%arg0: i32, %arg1: memref<128x16xf32, #tpu.memory_space<vmem>>, %arg2: memref<32x16xf32, #tpu.memory_space<vmem>>, %arg3: memref<32x1xf32, #tpu.memory_space<vmem>>, %arg4: memref<16x128xf32, #tpu.memory_space<vmem>>, %arg5: memref<1x1x128xi32, #tpu.memory_space<vmem>>, %arg6: memref<1x1x128xf32, #tpu.memory_space<vmem>>) attributes {dimension_semantics = [#tpu.dimension_semantics<parallel>], iteration_bounds = array<i64: 1>, scalar_prefetch = 0 : i64, scratch_operands = 0 : i64, tpu.core_type = #tpu.core_type<tc>, window_params = [{transform_indices = @transform_0, window_bounds = array<i64: 128, 16>}, {pipeline_mode = #tpu.pipeline_mode<synchronous>, transform_indices = @transform_1, window_bounds = array<i64: 32, 16>}, {pipeline_mode = #tpu.pipeline_mode<synchronous>, transform_indices = @transform_2, window_bounds = array<i64: 32, 1>}, {transform_indices = @transform_3, window_bounds = array<i64: 16, 128>}, {transform_indices = @transform_4, window_bounds = array<i64: 1, 1, 128>}, {transform_indices = @transform_5, window_bounds = array<i64: 1, 1, 128>}]} {
    %c0 = arith.constant 0 : index
    %c0_0 = arith.constant 0 : index
    %0 = vector.load %arg1[%c0, %c0_0] : memref<128x16xf32, #tpu.memory_space<vmem>>, vector<128x16xf32>
    %c0_1 = arith.constant 0 : index
    %c0_2 = arith.constant 0 : index
    %1 = vector.load %arg2[%c0_1, %c0_2] : memref<32x16xf32, #tpu.memory_space<vmem>>, vector<32x16xf32>
    %c0_3 = arith.constant 0 : index
    %c0_4 = arith.constant 0 : index
    %2 = vector.load %arg3[%c0_3, %c0_4] : memref<32x1xf32, #tpu.memory_space<vmem>>, vector<32x1xf32>
    %cst = arith.constant dense<0.000000e+00> : vector<32x128xf32>
    %3 = tpu.matmul %1, %0, %cst {dimension_numbers = #tpu.dot_dimension_numbers<[1], [1], [0], [0], [0, 0, 1, 0], [], []>} : vector<32x16xf32>, vector<128x16xf32>, vector<32x128xf32> -> vector<32x128xf32>
    %4 = vector.broadcast %2 : vector<32x1xf32> to vector<32x128xf32>
    %5 = arith.subf %4, %3 : vector<32x128xf32>
    %cst_5 = arith.constant dense<0x7F800000> : vector<128xf32>
    %6 = vector.multi_reduction <minimumf>, %5, %cst_5 [0] : vector<32x128xf32> to vector<128xf32>
    %7 = vector.shape_cast %6 : vector<128xf32> to vector<1x128xf32>
    %8 = tpu.iota {dimensions = array<i32: 0>} : vector<32x128xi32>
    %9 = vector.broadcast %7 : vector<1x128xf32> to vector<32x128xf32>
    %10 = arith.cmpf oeq, %5, %9 : vector<32x128xf32>
    %c32_i32 = arith.constant 32 : i32
    %11 = vector.broadcast %c32_i32 : i32 to vector<32x128xi32>
    %12 = arith.select %10, %8, %11 : vector<32x128xi1>, vector<32x128xi32>
    %cst_6 = arith.constant dense<2147483647> : vector<128xi32>
    %13 = vector.multi_reduction <minsi>, %12, %cst_6 [0] : vector<32x128xi32> to vector<128xi32>
    %14 = vector.shape_cast %13 : vector<128xi32> to vector<1x128xi32>
    %15 = vector.broadcast %14 : vector<1x128xi32> to vector<32x128xi32>
    %16 = arith.cmpi eq, %8, %15 : vector<32x128xi32>
    %17 = arith.extui %16 : vector<32x128xi1> to vector<32x128xi32>
    %18 = arith.sitofp %17 : vector<32x128xi32> to vector<32x128xf32>
    %cst_7 = arith.constant dense<0.000000e+00> : vector<16x128xf32>
    %19 = tpu.matmul %1, %18, %cst_7 {dimension_numbers = #tpu.dot_dimension_numbers<[0], [0], [1], [1], [0, 1, 1, 1], [], []>} : vector<32x16xf32>, vector<32x128xf32>, vector<16x128xf32> -> vector<16x128xf32>
    %c0_8 = arith.constant 0 : index
    %c0_9 = arith.constant 0 : index
    %20 = vector.load %arg4[%c0_8, %c0_9] : memref<16x128xf32, #tpu.memory_space<vmem>>, vector<16x128xf32>
    tpu.vector_store %arg4[%c0_8, %c0_9], %19 {strides = array<i32>} : memref<16x128xf32, #tpu.memory_space<vmem>>, vector<16x128xf32>,
    %21 = tpu.transpose %0, [1, 0] : vector<128x16xf32> -> vector<16x128xf32>
    %22 = arith.subf %19, %21 : vector<16x128xf32>
    %23 = arith.mulf %22, %22 : vector<16x128xf32>
    %cst_10 = arith.constant dense<0.000000e+00> : vector<128xf32>
    %24 = vector.multi_reduction <add>, %23, %cst_10 [0] : vector<16x128xf32> to vector<128xf32>
    %25 = vector.shape_cast %24 : vector<128xf32> to vector<1x128xf32>
    %26 = vector.shape_cast %14 : vector<1x128xi32> to vector<1x1x128xi32>
    %c0_11 = arith.constant 0 : index
    %c0_12 = arith.constant 0 : index
    %c0_13 = arith.constant 0 : index
    %27 = vector.load %arg5[%c0_11, %c0_12, %c0_13] : memref<1x1x128xi32, #tpu.memory_space<vmem>>, vector<1x1x128xi32>
    tpu.vector_store %arg5[%c0_11, %c0_12, %c0_13], %26 {strides = array<i32>} : memref<1x1x128xi32, #tpu.memory_space<vmem>>, vector<1x1x128xi32>,
    %28 = vector.shape_cast %25 : vector<1x128xf32> to vector<1x1x128xf32>
    %c0_14 = arith.constant 0 : index
    %c0_15 = arith.constant 0 : index
    %c0_16 = arith.constant 0 : index
    %29 = vector.load %arg6[%c0_14, %c0_15, %c0_16] : memref<1x1x128xf32, #tpu.memory_space<vmem>>, vector<1x1x128xf32>
    tpu.vector_store %arg6[%c0_14, %c0_15, %c0_16], %28 {strides = array<i32>} : memref<1x1x128xf32, #tpu.memory_space<vmem>>, vector<1x1x128xf32>,
    return
  }
  func.func @transform_0(%arg0: i32) -> (i32, i32) {
    %c0_i32 = arith.constant 0 : i32
    %c0_i32_0 = arith.constant 0 : i32
    return %arg0, %c0_i32 : i32, i32
  }
  func.func @transform_1(%arg0: i32) -> (i32, i32) {
    %c0_i32 = arith.constant 0 : i32
    %c0_i32_0 = arith.constant 0 : i32
    %c0_i32_1 = arith.constant 0 : i32
    return %c0_i32, %c0_i32_0 : i32, i32
  }
  func.func @transform_2(%arg0: i32) -> (i32, i32) {
    %c0_i32 = arith.constant 0 : i32
    %c0_i32_0 = arith.constant 0 : i32
    %c0_i32_1 = arith.constant 0 : i32
    return %c0_i32, %c0_i32_0 : i32, i32
  }
  func.func @transform_3(%arg0: i32) -> (i32, i32) {
    %c0_i32 = arith.constant 0 : i32
    %c0_i32_0 = arith.constant 0 : i32
    return %c0_i32, %arg0 : i32, i32
  }
  func.func @transform_4(%arg0: i32) -> (i32, i32, i32) {
    %c0_i32 = arith.constant 0 : i32
    %c0_i32_0 = arith.constant 0 : i32
    %c0_i32_1 = arith.constant 0 : i32
    return %arg0, %c0_i32, %c0_i32_0 : i32, i32, i32
  }
  func.func @transform_5(%arg0: i32) -> (i32, i32, i32) {
    %c0_i32 = arith.constant 0 : i32
    %c0_i32_0 = arith.constant 0 : i32
    %c0_i32_1 = arith.constant 0 : i32
    return %arg0, %c0_i32, %c0_i32_0 : i32, i32, i32
  }
}

</mosaic_0001>

<llo_original>
// kernel: tpu_custom_call.1
$region0: #{tpu_custom_call.1}
  #allocation0 [shape = 'u32[]', space=smem, size = 0x4, offset = 0x4, fixed_abs, tag = 'smem constant byte address 0x4 - core index']
  #allocation1 [shape = 'u32[72,128]{1,0:T(1,128)}', space=vmem, size = 0x9000, scoped, tag = 'internal scratch']
  %s0 = inlined_call_operand.vmem [shape: f32[128,16], index: 0, kind: input, shape index: {}]
  %s1 = inlined_call_operand.vmem [shape: f32[32,16], index: 1, kind: input, shape index: {}]
  %s2 = inlined_call_operand.vmem [shape: f32[32,1], index: 2, kind: input, shape index: {}]
  %s3 = inlined_call_operand.hbm [shape: f32[16,128], index: 3, kind: output, shape index: {0}]
  %s4 = inlined_call_operand.hbm [shape: s32[1,1,128], index: 4, kind: output, shape index: {1}]
  %s5 = inlined_call_operand.hbm [shape: f32[1,1,128], index: 5, kind: output, shape index: {2}]
  %6 = xla_tuple %s3, %s4, %s5
  %s7 = sld [smem:[#allocation0]]
  $region38: #{tpu_custom_call.1} parent=0
    _
  %s9 = ssub.s32 1, %s7
  %s10 = scalar_select 0, %s9, %s7
  $region1: #{tpu_custom_call.1} parent=0
    #allocation2 [shape = 'u8[8192]{0}', space=vmem, size = 0x2000, scoped, tag = 'output window, operand 0, single buffered']
    #allocation3 [shape = 's32[1]{0}', space=sflag, size = 0x4, scoped, tag = 'scoped memory for tpu_custom_call.1']
    #allocation4 [shape = 'u8[512]{0}', space=vmem, size = 0x400, scoped, tag = 'output window, operand 1, single buffered']
    #allocation5 [shape = 's32[1]{0}', space=sflag, size = 0x4, scoped, tag = 'scoped memory for tpu_custom_call.1']
    #allocation6 [shape = 'u8[512]{0}', space=vmem, size = 0x400, scoped, tag = 'output window, operand 2, single buffered']
    %11 = vsyncpa [#allocation3], 0
    %12 = vsyncpa [#allocation5], 0
    // Predicated region
    $region2: #{tpu_custom_call.1} parent=1 // pred_check
      _
    $region3: #{tpu_custom_call.1} parent=1 // pred_check_branch
      %14 = sbr.rel (0) target = $region5
    $region4: #{tpu_custom_call.1} parent=1 // pred_region
      _
    $region5: #{tpu_custom_call.1} parent=1 // pred_fallthru
      _
    // Predicated region
    $region6: #{tpu_custom_call.1} parent=1 // pred_check
      _
    $region7: #{tpu_custom_call.1} parent=1 // pred_check_branch
      %16 = sbr.rel (0) target = $region9
    $region8: #{tpu_custom_call.1} parent=1 // pred_region
      _
    $region9: #{tpu_custom_call.1} parent=1 // pred_fallthru
      _
    // Predicated region
    $region10: #{tpu_custom_call.1} parent=1 // pred_check
      _
    $region11: #{tpu_custom_call.1} parent=1 // pred_check_branch
      %18 = sbr.rel (0) target = $region13
    $region12: #{tpu_custom_call.1} parent=1 // pred_region
      _
    $region13: #{tpu_custom_call.1} parent=1 // pred_fallthru
      _
    %v19 = vld [vmem:[%s0] sm:$0xff]
    %v20 = vld [vmem:[%s0 + $0x8] sm:$0xff]
    %v21 = vld [vmem:[%s0 + $0x10] sm:$0xff]
    %v22 = vld [vmem:[%s0 + $0x18] sm:$0xff]
    %v23 = vld [vmem:[%s0 + $0x20] sm:$0xff]
    %v24 = vld [vmem:[%s0 + $0x28] sm:$0xff]
    %v25 = vld [vmem:[%s0 + $0x30] sm:$0xff]
    %v26 = vld [vmem:[%s0 + $0x38] sm:$0xff]
    %v27 = vld [vmem:[%s0 + $0x40] sm:$0xff]
    %v28 = vld [vmem:[%s0 + $0x48] sm:$0xff]
    %v29 = vld [vmem:[%s0 + $0x50] sm:$0xff]
    %v30 = vld [vmem:[%s0 + $0x58] sm:$0xff]
    %v31 = vld [vmem:[%s0 + $0x60] sm:$0xff]
    %v32 = vld [vmem:[%s0 + $0x68] sm:$0xff]
    %v33 = vld [vmem:[%s0 + $0x70] sm:$0xff]
    %v34 = vld [vmem:[%s0 + $0x78] sm:$0xff]
    %v35 = vld [vmem:[%s1] sm:$0xff]
    %v36 = vld [vmem:[%s1 + $0x8] sm:$0xff]
    %v37 = vld [vmem:[%s1 + $0x10] sm:$0xff]
    %v38 = vld [vmem:[%s1 + $0x18] sm:$0xff]
    %v39 = vld [vmem:[%s2] sm:$0xff]
    %v40 = vld [vmem:[%s2 + $0x8] sm:$0xff]
    %v41 = vld [vmem:[%s2 + $0x10] sm:$0xff]
    %v42 = vld [vmem:[%s2 + $0x18] sm:$0xff]
    %vm43 = vcmask 130048
    %v45 = vsel %vm43, %v35, 0
    %v48 = vsel %vm43, %v36, 0
    %v51 = vsel %vm43, %v37, 0
    %v54 = vsel %vm43, %v38, 0
    %v57 = vsel %vm43, %v19, 0
    %v60 = vsel %vm43, %v20, 0
    %v63 = vsel %vm43, %v21, 0
    %v66 = vsel %vm43, %v22, 0
    %v69 = vsel %vm43, %v23, 0
    %v72 = vsel %vm43, %v24, 0
    %v75 = vsel %vm43, %v25, 0
    %v78 = vsel %vm43, %v26, 0
    %v81 = vsel %vm43, %v27, 0
    %v84 = vsel %vm43, %v28, 0
    %v87 = vsel %vm43, %v29, 0
    %v90 = vsel %vm43, %v30, 0
    %v93 = vsel %vm43, %v31, 0
    %v96 = vsel %vm43, %v32, 0
    %v99 = vsel %vm43, %v33, 0
    %v102 = vsel %vm43, %v34, 0
    %104 = vmatpush.xpose.msra.mxu0 %v102
    %105 = vmatpush.xpose.msra.mxu0 %v99
    %106 = vmatpush.xpose.msra.mxu0 %v96
    %107 = vmatpush.xpose.msra.mxu0 %v93
    %108 = vmatpush.xpose.msra.mxu0 %v90
    %109 = vmatpush.xpose.msra.mxu0 %v87
    %110 = vmatpush.xpose.msra.mxu0 %v84
    %111 = vmatpush.xpose.msra.mxu0 %v81
    %112 = vmatpush.xpose.msra.mxu0 %v78
    %113 = vmatpush.xpose.msra.mxu0 %v75
    %114 = vmatpush.xpose.msra.mxu0 %v72
    %115 = vmatpush.xpose.msra.mxu0 %v69
    %116 = vmatpush.xpose.msra.mxu0 %v66
    %117 = vmatpush.xpose.msra.mxu0 %v63
    %118 = vmatpush.xpose.msra.mxu0 %v60
    %119 = vmatpush.xpose.msra.mxu0 %v57
    %120 = vmatmul.f32.gmra.mxu0 %v45
    %v121 = vpop.f32.mrf.mxu0
    %v122 = vadd.f32 0.0, %v121
    %123 = vmatmul.f32.gmra.mxu0 %v48
    %v124 = vpop.f32.mrf.mxu0
    %v125 = vadd.f32 0.0, %v124
    %126 = vmatmul.f32.gmra.mxu0 %v51
    %v127 = vpop.f32.mrf.mxu0
    %v128 = vadd.f32 0.0, %v127
    %129 = vmatmul.f32.gmra.mxu0 %v54
    %v130 = vpop.f32.mrf.mxu0
    %v131 = vadd.f32 0.0, %v130
    %132 = vdwg.mxu0
    %134 = vset.pattern.permute.xlu0 0
    %135 = vperm.xlu0 %134, %v39
    %v136 = vpop.permute.xlu0 %135
    %139 = vset.pattern.permute.xlu0 0
    %140 = vperm.xlu0 %139, %v40
    %v141 = vpop.permute.xlu0 %140
    %144 = vset.pattern.permute.xlu0 0
    %145 = vperm.xlu0 %144, %v41
    %v146 = vpop.permute.xlu0 %145
    %149 = vset.pattern.permute.xlu0 0
    %150 = vperm.xlu0 %149, %v42
    %v151 = vpop.permute.xlu0 %150
    %v153 = vsub.f32 %v136, %v122
    %v154 = vsub.f32 %v141, %v125
    %v155 = vsub.f32 %v146, %v128
    %v156 = vsub.f32 %v151, %v131
    %v157 = vmin.f32 %v153, %v154
    %v158 = vmin.f32 %v155, %v156
    %v159 = vmin.f32 %v157, %v158
    %v160 = vrot.slane %v159, 4
    %v161 = vmin.f32 %v159, %v160
    %v162 = vrot.slane %v161, 2
    %v163 = vmin.f32 %v161, %v162
    %v164 = vrot.slane %v163, 1
    %v165 = vmin.f32 %v163, %v164
    %v166 = vlaneseq
    %v167 = vshrl.u32 %v166, 7
    %v168 = vadd.s32 %v167, 8
    %v169 = vadd.s32 %v167, 16
    %v170 = vadd.s32 %v167, 24
    %vm171 = vcmp.eq.f32.partialorder %v153, %v165
    %vm172 = vcmp.eq.f32.partialorder %v154, %v165
    %vm173 = vcmp.eq.f32.partialorder %v155, %v165
    %vm174 = vcmp.eq.f32.partialorder %v156, %v165
    %v175 = vsel %vm171, %v167, 32
    %v176 = vsel %vm172, %v168, 32
    %v177 = vsel %vm173, %v169, 32
    %v178 = vsel %vm174, %v170, 32
    %vm179 = vcmp.lt.s32.totalorder %v175, %v176
    %v180 = vsel %vm179, %v175, %v176
    %vm181 = vcmp.lt.s32.totalorder %v177, %v178
    %v182 = vsel %vm181, %v177, %v178
    %vm183 = vcmp.lt.s32.totalorder %v180, %v182
    %v184 = vsel %vm183, %v180, %v182
    %v185 = vrot.slane %v184, 4
    %vm186 = vcmp.lt.s32.totalorder %v184, %v185
    %v187 = vsel %vm186, %v184, %v185
    %v188 = vrot.slane %v187, 2
    %vm189 = vcmp.lt.s32.totalorder %v187, %v188
    %v190 = vsel %vm189, %v187, %v188
    %v191 = vrot.slane %v190, 1
    %vm192 = vcmp.lt.s32.totalorder %v190, %v191
    %v193 = vsel %vm192, %v190, %v191
    %vm194 = vcmp.eq.s32.totalorder %v167, %v193
    %vm195 = vcmp.eq.s32.totalorder %v168, %v193
    %vm196 = vcmp.eq.s32.totalorder %v169, %v193
    %vm197 = vcmp.eq.s32.totalorder %v170, %v193
    %v198 = vsel %vm194, 1, 0
    %v199 = vsel %vm195, 1, 0
    %v200 = vsel %vm196, 1, 0
    %v201 = vsel %vm197, 1, 0
    %v202 = vcvt.s32.f32 %v198
    %v203 = vcvt.s32.f32 %v199
    %v204 = vcvt.s32.f32 %v200
    %v205 = vcvt.s32.f32 %v201
    %206 = vxpose.xlu0.b32.start [1/16] %v35, 128
    %207 = vxpose.xlu0.b32.cont [2/16] %v36, 128
    %208 = vxpose.xlu0.b32.cont [3/16] %v37, 128
    %209 = vxpose.xlu0.b32.cont [4/16] %v38, 128
    %210 = vxpose.xlu0.b32.cont [5/16] 0.0, 128
    %211 = vxpose.xlu0.b32.cont [6/16] 0.0, 128
    %212 = vxpose.xlu0.b32.cont [7/16] 0.0, 128
    %213 = vxpose.xlu0.b32.cont [8/16] 0.0, 128
    %214 = vxpose.xlu0.b32.cont [9/16] 0.0, 128
    %215 = vxpose.xlu0.b32.cont [10/16] 0.0, 128
    %216 = vxpose.xlu0.b32.cont [11/16] 0.0, 128
    %217 = vxpose.xlu0.b32.cont [12/16] 0.0, 128
    %218 = vxpose.xlu0.b32.cont [13/16] 0.0, 128
    %219 = vxpose.xlu0.b32.cont [14/16] 0.0, 128
    %220 = vxpose.xlu0.b32.cont [15/16] 0.0, 128
    %221 = vxpose.xlu0.b32.end [16/16] 0.0, 128
    %v222 = vpop.trf.xlu0
    %v223 = vpop.trf.xlu0
    %v224 = vpop.trf.xlu0
    %v225 = vpop.trf.xlu0
    %v226 = vpop.trf.xlu0
    %v227 = vpop.trf.xlu0
    %v228 = vpop.trf.xlu0
    %v229 = vpop.trf.xlu0
    %v230 = vpop.trf.xlu0
    %v231 = vpop.trf.xlu0
    %v232 = vpop.trf.xlu0
    %v233 = vpop.trf.xlu0
    %v234 = vpop.trf.xlu0
    %v235 = vpop.trf.xlu0
    %v236 = vpop.trf.xlu0
    %v237 = vpop.trf.xlu0
    %vm238 = vcmask 261120
    %v240 = vsel %vm238, %v222, 0
    %v243 = vsel %vm238, %v223, 0
    %245 = vmatpush.msra.mxu0 0.0
    %246 = vmatpush.msra.mxu0 0.0
    %247 = vmatpush.msra.mxu0 0.0
    %248 = vmatpush.msra.mxu0 0.0
    %249 = vmatpush.msra.mxu0 0.0
    %250 = vmatpush.msra.mxu0 0.0
    %251 = vmatpush.msra.mxu0 0.0
    %252 = vmatpush.msra.mxu0 0.0
    %253 = vmatpush.msra.mxu0 0.0
    %254 = vmatpush.msra.mxu0 0.0
    %255 = vmatpush.msra.mxu0 0.0
    %256 = vmatpush.msra.mxu0 0.0
    %257 = vmatpush.msra.mxu0 %v205
    %258 = vmatpush.msra.mxu0 %v204
    %259 = vmatpush.msra.mxu0 %v203
    %260 = vmatpush.msra.mxu0 %v202
    %261 = vmatmul.f32.gmra.mxu0 %v240
    %v262 = vpop.f32.mrf.mxu0
    %v263 = vadd.f32 0.0, %v262
    %264 = vmatmul.f32.gmra.mxu0 %v243
    %v265 = vpop.f32.mrf.mxu0
    %v266 = vadd.f32 0.0, %v265
    %267 = vdwg.mxu0
    %268 = vst [vmem:[#allocation2] sm:$0xff] %v263
    %269 = vst [vmem:[#allocation2 + $0x8] sm:$0xff] %v266
    %270 = vxpose.xlu0.b32.start [1/16] %v19, 128
    %271 = vxpose.xlu0.b32.cont [2/16] %v20, 128
    %272 = vxpose.xlu0.b32.cont [3/16] %v21, 128
    %273 = vxpose.xlu0.b32.cont [4/16] %v22, 128
    %274 = vxpose.xlu0.b32.cont [5/16] %v23, 128
    %275 = vxpose.xlu0.b32.cont [6/16] %v24, 128
    %276 = vxpose.xlu0.b32.cont [7/16] %v25, 128
    %277 = vxpose.xlu0.b32.cont [8/16] %v26, 128
    %278 = vxpose.xlu0.b32.cont [9/16] %v27, 128
    %279 = vxpose.xlu0.b32.cont [10/16] %v28, 128
    %280 = vxpose.xlu0.b32.cont [11/16] %v29, 128
    %281 = vxpose.xlu0.b32.cont [12/16] %v30, 128
    %282 = vxpose.xlu0.b32.cont [13/16] %v31, 128
    %283 = vxpose.xlu0.b32.cont [14/16] %v32, 128
    %284 = vxpose.xlu0.b32.cont [15/16] %v33, 128
    %285 = vxpose.xlu0.b32.end [16/16] %v34, 128
    %v286 = vpop.trf.xlu0
    %v287 = vpop.trf.xlu0
    %v288 = vpop.trf.xlu0
    %v289 = vpop.trf.xlu0
    %v290 = vpop.trf.xlu0
    %v291 = vpop.trf.xlu0
    %v292 = vpop.trf.xlu0
    %v293 = vpop.trf.xlu0
    %v294 = vpop.trf.xlu0
    %v295 = vpop.trf.xlu0
    %v296 = vpop.trf.xlu0
    %v297 = vpop.trf.xlu0
    %v298 = vpop.trf.xlu0
    %v299 = vpop.trf.xlu0
    %v300 = vpop.trf.xlu0
    %v301 = vpop.trf.xlu0
    %v302 = vsub.f32 %v263, %v286
    %v303 = vsub.f32 %v266, %v287
    %v304 = vmul.f32 %v302, %v302
    %v305 = vmul.f32 %v303, %v303
    %v306 = vadd.f32 %v304, %v305
    %v307 = vrot.slane %v306, 4
    %v308 = vadd.f32 %v306, %v307
    %v309 = vrot.slane %v308, 2
    %v310 = vadd.f32 %v308, %v309
    %v311 = vrot.slane %v310, 1
    %v312 = vadd.f32 %v310, %v311
    %313 = vst [vmem:[#allocation4] sm:$0x1] %v193
    %314 = vst [vmem:[#allocation6] sm:$0x1] %v312
    // Predicated region
    $region14: #{tpu_custom_call.1} parent=1 // pred_check
      _
    $region15: #{tpu_custom_call.1} parent=1 // pred_check_branch
      %316 = sbr.rel (0) target = $region17
    $region16: #{tpu_custom_call.1} parent=1 // pred_region
      %318 = vsyncadd [#allocation3], 0
      %s319 = sshll.u32 [#allocation2], 4
      %s320 = int_to_ptr.vmem [resolvable:$true] %s319
      %s321 = sshll.u32 %s3, 4
      %s322 = int_to_ptr.hbm [resolvable:$true] %s321
      %327 = dma.vmem_to_hbm [thread:$0]  %s320, 256, %s322, [#allocation3], 128, 128, 8
    $region17: #{tpu_custom_call.1} parent=1 // pred_fallthru
      _
    // Predicated region
    $region18: #{tpu_custom_call.1} parent=1 // pred_check
      _
    $region19: #{tpu_custom_call.1} parent=1 // pred_check_branch
      %329 = sbr.rel (0) target = $region21
    $region20: #{tpu_custom_call.1} parent=1 // pred_region
      %331 = vsyncadd [#allocation5], 0
      %s333 = sshll.u32 [#allocation4], 4
      %s334 = int_to_ptr.vmem [resolvable:$true] %s333
      %s335 = sshll.u32 %s4, 4
      %s336 = int_to_ptr.hbm [resolvable:$true] %s335
      %338 = dma.vmem_to_hbm [thread:$0]  %s334, 16, %s336, [#allocation5]
    $region21: #{tpu_custom_call.1} parent=1 // pred_fallthru
      _
    // Predicated region
    $region22: #{tpu_custom_call.1} parent=1 // pred_check
      _
    $region23: #{tpu_custom_call.1} parent=1 // pred_check_branch
      %340 = sbr.rel (0) target = $region25
    $region24: #{tpu_custom_call.1} parent=1 // pred_region
      %342 = vsyncadd [#allocation5], 0
      %s344 = sshll.u32 [#allocation6], 4
      %s345 = int_to_ptr.vmem [resolvable:$true] %s344
      %s346 = sshll.u32 %s5, 4
      %s347 = int_to_ptr.hbm [resolvable:$true] %s346
      %349 = dma.vmem_to_hbm [thread:$0]  %s345, 16, %s347, [#allocation5]
    $region25: #{tpu_custom_call.1} parent=1 // pred_fallthru
      _
    // Predicated region
    $region26: #{tpu_custom_call.1} parent=1 // pred_check
      _
    $region27: #{tpu_custom_call.1} parent=1 // pred_check_branch
      %351 = sbr.rel (0) target = $region29
    $region28: #{tpu_custom_call.1} parent=1 // pred_region
      %353 = dma.done [#allocation3], 256
    $region29: #{tpu_custom_call.1} parent=1 // pred_fallthru
      _
    // Predicated region
    $region30: #{tpu_custom_call.1} parent=1 // pred_check
      _
    $region31: #{tpu_custom_call.1} parent=1 // pred_check_branch
      %355 = sbr.rel (0) target = $region33
    $region32: #{tpu_custom_call.1} parent=1 // pred_region
      %357 = dma.done [#allocation5], 16
    $region33: #{tpu_custom_call.1} parent=1 // pred_fallthru
      _
    // Predicated region
    $region34: #{tpu_custom_call.1} parent=1 // pred_check
      _
    $region35: #{tpu_custom_call.1} parent=1 // pred_check_branch
      %359 = sbr.rel (0) target = $region37
    $region36: #{tpu_custom_call.1} parent=1 // pred_region
      %361 = dma.done [#allocation5], 16
    $region37: #{tpu_custom_call.1} parent=1 // pred_fallthru
      _
    %362 = vsyncpa [#allocation3], 1
    %363 = vsyncpa [#allocation5], 1

</llo_original>
